<compile_context>
chip_gen: v6e
topology: v6e:2x2x1
jax: 0.10.0
libtpu: 0.0.40
codegen_flags: <defaults>
</compile_context>

<pallas_src>
import functools

import jax
import jax.numpy as jnp
from jax.experimental import pallas as pl
from jax.experimental.pallas import tpu as pltpu

_NEG_INF = -1e30
_LANE = 128
_SUBLANE = 8
_NEG_SLOPE = 0.2  # PyG GATConv default


def _round_up(x, m):
    return (x + m - 1) // m * m


# ----------------------------- Pallas kernel --------------------------------
def _gat_fused_kernel(mask_ref, x_ref, w_ref, asrc_ref, adst_ref, b_ref,
                      o_ref, x_scr, *, negative_slope):
    """One grid step == one GATConv layer; x carried in VMEM scratch."""
    layer = pl.program_id(0)
    is_last = layer == pl.num_programs(0) - 1

    @pl.when(layer == 0)
    def _():
        x_scr[...] = x_ref[...]

    x = x_scr[...]                                            # [Np, Dp] f32
    w = w_ref[0]                                              # [Dp, Dp]
    h = jnp.dot(x, w, preferred_element_type=jnp.float32)     # [Np, Dp] (MXU)

    a_dst = adst_ref[0]                                       # [1, Dp]
    a_src = asrc_ref[0]                                       # [Dp, 1]
    # d[i] = h[i]·a_dst  (lane reduce) ; s[j] = h[j]·a_src as a row vector
    d_col = jnp.sum(h * a_dst, axis=-1, keepdims=True)        # [Np, 1]
    s_row = jnp.sum(h.T * a_src, axis=0, keepdims=True)       # [1, Np]

    raw = d_col + s_row                                       # [Np, Np]
    raw = jnp.where(raw > 0, raw, negative_slope * raw)       # LeakyReLU
    logits = raw + mask_ref[...]                              # 0 on edges, -1e30 off
    m = jnp.max(logits, axis=-1, keepdims=True)
    p = jnp.exp(logits - m)
    alpha = p / jnp.sum(p, axis=-1, keepdims=True)            # softmax over neighbors

    out = jnp.dot(alpha, h, preferred_element_type=jnp.float32) + b_ref[0]

    # ReLU between layers (the value stored after the last layer is unused).
    x_scr[...] = jnp.maximum(out, 0.0)

    @pl.when(is_last)
    def _():
        o_ref[...] = out.astype(o_ref.dtype)                  # no ReLU on last layer


def _gat_pallas(mask, x_pad, w, asrc, adst, bias):
    num_layers, dp, _ = w.shape
    np_ = x_pad.shape[0]
    kernel = functools.partial(_gat_fused_kernel, negative_slope=_NEG_SLOPE)
    return pl.pallas_call(
        kernel,
        out_shape=jax.ShapeDtypeStruct((np_, dp), jnp.float32),
        grid_spec=pltpu.PrefetchScalarGridSpec(
            num_scalar_prefetch=0,
            grid=(num_layers,),
            in_specs=[
                pl.BlockSpec((np_, np_), lambda l: (0, 0)),     # mask (VMEM-resident)
                pl.BlockSpec((np_, dp), lambda l: (0, 0)),      # x0   (VMEM-resident)
                pl.BlockSpec((1, dp, dp), lambda l: (l, 0, 0)),  # W per layer
                pl.BlockSpec((1, dp, 1), lambda l: (l, 0, 0)),   # att_src (column)
                pl.BlockSpec((1, 1, dp), lambda l: (l, 0, 0)),   # att_dst (row)
                pl.BlockSpec((1, 1, dp), lambda l: (l, 0, 0)),   # bias
            ],
            out_specs=pl.BlockSpec((np_, dp), lambda l: (0, 0)),
            scratch_shapes=[pltpu.VMEM((np_, dp), jnp.float32)],
        ),
        compiler_params=pltpu.CompilerParams(
            dimension_semantics=("arbitrary",)),
    )(mask, x_pad, w, asrc, adst, bias)


# ------------------------------ jitted forward -------------------------------
@jax.jit
def gat_processor_forward(params, node_hidden, edge_hidden, edge_index):
    w = params["w"]             # [L, D, D]
    a_src = params["att_src"]   # [L, D]
    a_dst = params["att_dst"]   # [L, D]
    b = params["bias"]          # [L, D]
    num_layers, d, _ = w.shape
    n = node_hidden.shape[0]
    np_ = _round_up(max(n, _SUBLANE), _SUBLANE)
    dp = _round_up(max(d, _LANE), _LANE)

    # Dense attention mask: 0 where edge (src -> dst) exists or on the diagonal
    # (add_self_loops), -1e30 elsewhere.  Padded nodes get only a self-loop so
    # their softmax stays finite; they never feed real nodes.
    src, dst = edge_index[0], edge_index[1]
    mask = jnp.full((np_, np_), _NEG_INF, jnp.float32)
    mask = mask.at[dst, src].set(0.0)
    diag = jnp.arange(np_)
    mask = mask.at[diag, diag].set(0.0)

    # Zero-pad features/params to 128 lanes (no-op mathematically).
    x_pad = jnp.zeros((np_, dp), jnp.float32).at[:n, :d].set(
        node_hidden.astype(jnp.float32))
    w_pad = jnp.zeros((num_layers, dp, dp), jnp.float32).at[:, :d, :d].set(w)
    asrc_pad = jnp.zeros((num_layers, dp, 1), jnp.float32).at[:, :d, 0].set(a_src)
    adst_pad = jnp.zeros((num_layers, 1, dp), jnp.float32).at[:, 0, :d].set(a_dst)
    b_pad = jnp.zeros((num_layers, 1, dp), jnp.float32).at[:, 0, :d].set(b)

    out = _gat_pallas(mask, x_pad, w_pad, asrc_pad, adst_pad, b_pad)
    return out[:n, :d], edge_hidden


class GATProcessorPallas:
    """num_layers GATConv(hidden_dim, hidden_dim, heads=1) with ReLU in between."""

    def __init__(self, num_layers, hidden_dim, key):
        ws, srcs, dsts, bs = [], [], [], []
        scale = 1.0 / jnp.sqrt(jnp.float32(hidden_dim))
        for _ in range(num_layers):
            key, kw, ks, kd, kb = jax.random.split(key, 5)
            ws.append(jax.random.uniform(kw, (hidden_dim, hidden_dim),
                                         jnp.float32, -scale, scale))
            srcs.append(jax.random.uniform(ks, (hidden_dim,), jnp.float32,
                                           -scale, scale))
            dsts.append(jax.random.uniform(kd, (hidden_dim,), jnp.float32,
                                           -scale, scale))
            bs.append(jax.random.uniform(kb, (hidden_dim,), jnp.float32,
                                         -scale, scale))
        self.params = {"w": jnp.stack(ws), "att_src": jnp.stack(srcs),
                       "att_dst": jnp.stack(dsts), "bias": jnp.stack(bs)}

    def __call__(self, node_hidden, edge_hidden, edge_index, edge_attr=None):
        # edge_attr ignored: PyG GATConv with edge_dim=None ignores it too.
        return gat_processor_forward(self.params, node_hidden, edge_hidden,
                                     edge_index)


# ------------------------------ reference -----------------------------------
def gat_reference(params, x, edge_index, negative_slope=_NEG_SLOPE):
    w, a_s, a_d, b = (params["w"], params["att_src"], params["att_dst"],
                      params["bias"])
    num_layers = w.shape[0]
    n = x.shape[0]
    src, dst = edge_index[0], edge_index[1]
    adj = jnp.zeros((n, n), bool).at[dst, src].set(True)
    adj = adj | jnp.eye(n, dtype=bool)                       # add self-loops
    h_cur = x
    for l in range(num_layers):
        h = h_cur @ w[l]
        s = h @ a_s[l]
        d = h @ a_d[l]
        e = d[:, None] + s[None, :]
        e = jnp.where(e > 0, e, negative_slope * e)
        e = jnp.where(adj, e, _NEG_INF)
        e = e - e.max(axis=1, keepdims=True)
        p = jnp.exp(e)
        alpha = p / p.sum(axis=1, keepdims=True)
        out = alpha @ h + b[l]
        h_cur = out if l == num_layers - 1 else jnp.maximum(out, 0.0)
    return h_cur


# --------------------------------- main --------------------------------------
if __name__ == "__main__":
    NUM_LAYERS = 3
    HIDDEN_DIM = 32
    NUM_NODES = 16
    EDGE_DIM = 32

    key = jax.random.PRNGKey(0)
    key, k_node, k_edge, k_params = jax.random.split(key, 4)

    node_hidden = jax.random.normal(k_node, (NUM_NODES, HIDDEN_DIM), jnp.float32)
    # one edge_hidden row per directed edge of the ring; passed through untouched
    edge_hidden = jax.random.normal(k_edge, (2 * NUM_NODES, EDGE_DIM), jnp.float32)

    # deterministic undirected ring graph: i <-> (i+1) mod N
    src = jnp.arange(NUM_NODES, dtype=jnp.int32)
    dst = (src + 1) % NUM_NODES
    edge_index = jnp.stack(
        [jnp.concatenate([src, dst]), jnp.concatenate([dst, src])], axis=0)

    model = GATProcessorPallas(NUM_LAYERS, HIDDEN_DIM, k_params)
    out_nodes, out_edges = model(node_hidden, edge_hidden, edge_index)
    jax.block_until_ready(out_nodes)
    jax.block_until_ready(out_edges)

    ref = gat_reference(model.params, node_hidden, edge_index)
    assert out_nodes.shape == (NUM_NODES, HIDDEN_DIM)
    assert out_edges.shape == edge_hidden.shape
    assert jnp.allclose(out_nodes, ref, atol=1e-4, rtol=1e-4), float(
        jnp.max(jnp.abs(out_nodes - ref)))
    assert jnp.allclose(out_edges, edge_hidden)

    # TODO(synk): parallel (duplicate) edges are deduplicated by the dense mask;
    # PyG's edge-wise softmax would count each copy separately.
    print("KERNEL_OK")
</pallas_src>

<mosaic_0001>
module attributes {stable_mosaic.version = 11 : i64} {
  func.func @_gat_fused_kernel(%arg0: i32, %arg1: memref<16x16xf32, #tpu.memory_space<vmem>>, %arg2: memref<16x128xf32, #tpu.memory_space<vmem>>, %arg3: memref<1x128x128xf32, #tpu.memory_space<vmem>>, %arg4: memref<1x128x1xf32, #tpu.memory_space<vmem>>, %arg5: memref<1x1x128xf32, #tpu.memory_space<vmem>>, %arg6: memref<1x1x128xf32, #tpu.memory_space<vmem>>, %arg7: memref<16x128xf32, #tpu.memory_space<vmem>>, %arg8: memref<16x128xf32, #tpu.memory_space<vmem>>) attributes {dimension_semantics = [#tpu.dimension_semantics<arbitrary>], iteration_bounds = array<i64: 3>, scalar_prefetch = 0 : i64, scratch_operands = 1 : i64, tpu.core_type = #tpu.core_type<tc>, window_params = [{pipeline_mode = #tpu.pipeline_mode<synchronous>, transform_indices = @transform_0, window_bounds = array<i64: 16, 16>}, {pipeline_mode = #tpu.pipeline_mode<synchronous>, transform_indices = @transform_1, window_bounds = array<i64: 16, 128>}, {transform_indices = @transform_2, window_bounds = array<i64: 1, 128, 128>}, {transform_indices = @transform_3, window_bounds = array<i64: 1, 128, 1>}, {transform_indices = @transform_4, window_bounds = array<i64: 1, 1, 128>}, {transform_indices = @transform_5, window_bounds = array<i64: 1, 1, 128>}, {pipeline_mode = #tpu.pipeline_mode<synchronous>, transform_indices = @transform_6, window_bounds = array<i64: 16, 128>}]} {
    %c2_i32 = arith.constant 2 : i32
    %0 = arith.cmpi eq, %arg0, %c2_i32 : i32
    %c0_i32 = arith.constant 0 : i32
    %1 = arith.cmpi eq, %arg0, %c0_i32 : i32
    %2 = arith.extui %1 : i1 to i32
    %c0_i32_0 = arith.constant 0 : i32
    %3 = arith.cmpi ne, %2, %c0_i32_0 : i32
    scf.if %3 {
      %c0_27 = arith.constant 0 : index
      %c0_28 = arith.constant 0 : index
      %50 = vector.load %arg2[%c0_27, %c0_28] : memref<16x128xf32, #tpu.memory_space<vmem>>, vector<16x128xf32>
      %c0_29 = arith.constant 0 : index
      %c0_30 = arith.constant 0 : index
      %51 = vector.load %arg8[%c0_29, %c0_30] : memref<16x128xf32, #tpu.memory_space<vmem>>, vector<16x128xf32>
      tpu.vector_store %arg8[%c0_29, %c0_30], %50 {strides = array<i32>} : memref<16x128xf32, #tpu.memory_space<vmem>>, vector<16x128xf32>,
    } else {
    }
    %c0 = arith.constant 0 : index
    %c0_1 = arith.constant 0 : index
    %4 = vector.load %arg8[%c0, %c0_1] : memref<16x128xf32, #tpu.memory_space<vmem>>, vector<16x128xf32>
    %c0_2 = arith.constant 0 : index
    %c0_3 = arith.constant 0 : index
    %c0_4 = arith.constant 0 : index
    %5 = vector.load %arg3[%c0_2, %c0_3, %c0_4] : memref<1x128x128xf32, #tpu.memory_space<vmem>>, vector<1x128x128xf32>
    %6 = vector.shape_cast %5 : vector<1x128x128xf32> to vector<128x128xf32>
    %cst = arith.constant dense<0.000000e+00> : vector<16x128xf32>
    %7 = tpu.matmul %4, %6, %cst {dimension_numbers = #tpu.dot_dimension_numbers<[1], [0], [0], [1], [0, 0, 1, 1], [], []>} : vector<16x128xf32>, vector<128x128xf32>, vector<16x128xf32> -> vector<16x128xf32>
    %c0_5 = arith.constant 0 : index
    %c0_6 = arith.constant 0 : index
    %c0_7 = arith.constant 0 : index
    %8 = vector.load %arg5[%c0_5, %c0_6, %c0_7] : memref<1x1x128xf32, #tpu.memory_space<vmem>>, vector<1x1x128xf32>
    %9 = vector.shape_cast %8 : vector<1x1x128xf32> to vector<1x128xf32>
    %c0_8 = arith.constant 0 : index
    %c0_9 = arith.constant 0 : index
    %c0_10 = arith.constant 0 : index
    %10 = vector.load %arg4[%c0_8, %c0_9, %c0_10] : memref<1x128x1xf32, #tpu.memory_space<vmem>>, vector<1x128x1xf32>
    %11 = vector.shape_cast %10 : vector<1x128x1xf32> to vector<128x1xf32>
    %12 = vector.broadcast %9 : vector<1x128xf32> to vector<16x128xf32>
    %13 = arith.mulf %7, %12 : vector<16x128xf32>
    %cst_11 = arith.constant dense<0.000000e+00> : vector<16xf32>
    %14 = vector.multi_reduction <add>, %13, %cst_11 [1] : vector<16x128xf32> to vector<16xf32>
    %15 = vector.shape_cast %14 : vector<16xf32> to vector<16x1xf32>
    %16 = tpu.transpose %7, [1, 0] : vector<16x128xf32> -> vector<128x16xf32>
    %17 = vector.broadcast %11 : vector<128x1xf32> to vector<128x16xf32>
    %18 = arith.mulf %16, %17 : vector<128x16xf32>
    %cst_12 = arith.constant dense<0.000000e+00> : vector<16xf32>
    %19 = vector.multi_reduction <add>, %18, %cst_12 [0] : vector<128x16xf32> to vector<16xf32>
    %20 = vector.shape_cast %19 : vector<16xf32> to vector<1x16xf32>
    %21 = vector.broadcast %15 : vector<16x1xf32> to vector<16x16xf32>
    %22 = vector.broadcast %20 : vector<1x16xf32> to vector<16x16xf32>
    %23 = arith.addf %21, %22 : vector<16x16xf32>
    %cst_13 = arith.constant 0.000000e+00 : f32
    %24 = vector.broadcast %cst_13 : f32 to vector<16x16xf32>
    %25 = arith.cmpf ogt, %23, %24 : vector<16x16xf32>
    %cst_14 = arith.constant 2.000000e-01 : f32
    %26 = vector.broadcast %cst_14 : f32 to vector<16x16xf32>
    %27 = arith.mulf %26, %23 : vector<16x16xf32>
    %28 = arith.select %25, %23, %27 : vector<16x16xi1>, vector<16x16xf32>
    %c0_15 = arith.constant 0 : index
    %c0_16 = arith.constant 0 : index
    %29 = vector.load %arg1[%c0_15, %c0_16] : memref<16x16xf32, #tpu.memory_space<vmem>>, vector<16x16xf32>
    %30 = arith.addf %28, %29 : vector<16x16xf32>
    %cst_17 = arith.constant dense<0xFF800000> : vector<16xf32>
    %31 = vector.multi_reduction <maximumf>, %30, %cst_17 [1] : vector<16x16xf32> to vector<16xf32>
    %32 = vector.shape_cast %31 : vector<16xf32> to vector<16x1xf32>
    %33 = vector.broadcast %32 : vector<16x1xf32> to vector<16x16xf32>
    %34 = arith.subf %30, %33 : vector<16x16xf32>
    %35 = math.exp %34 : vector<16x16xf32>
    %cst_18 = arith.constant dense<0.000000e+00> : vector<16xf32>
    %36 = vector.multi_reduction <add>, %35, %cst_18 [1] : vector<16x16xf32> to vector<16xf32>
    %37 = vector.shape_cast %36 : vector<16xf32> to vector<16x1xf32>
    %38 = vector.broadcast %37 : vector<16x1xf32> to vector<16x16xf32>
    %39 = arith.divf %35, %38 : vector<16x16xf32>
    %cst_19 = arith.constant dense<0.000000e+00> : vector<16x128xf32>
    %40 = tpu.matmul %39, %7, %cst_19 {dimension_numbers = #tpu.dot_dimension_numbers<[1], [0], [0], [1], [0, 0, 1, 1], [], []>} : vector<16x16xf32>, vector<16x128xf32>, vector<16x128xf32> -> vector<16x128xf32>
    %c0_20 = arith.constant 0 : index
    %c0_21 = arith.constant 0 : index
    %c0_22 = arith.constant 0 : index
    %41 = vector.load %arg6[%c0_20, %c0_21, %c0_22] : memref<1x1x128xf32, #tpu.memory_space<vmem>>, vector<1x1x128xf32>
    %42 = vector.shape_cast %41 : vector<1x1x128xf32> to vector<1x128xf32>
    %43 = vector.broadcast %42 : vector<1x128xf32> to vector<16x128xf32>
    %44 = arith.addf %40, %43 : vector<16x128xf32>
    %cst_23 = arith.constant 0.000000e+00 : f32
    %45 = vector.broadcast %cst_23 : f32 to vector<16x128xf32>
    %46 = arith.maximumf %44, %45 : vector<16x128xf32>
    %c0_24 = arith.constant 0 : index
    %c0_25 = arith.constant 0 : index
    %47 = vector.load %arg8[%c0_24, %c0_25] : memref<16x128xf32, #tpu.memory_space<vmem>>, vector<16x128xf32>
    tpu.vector_store %arg8[%c0_24, %c0_25], %46 {strides = array<i32>} : memref<16x128xf32, #tpu.memory_space<vmem>>, vector<16x128xf32>,
    %48 = arith.extui %0 : i1 to i32
    %c0_i32_26 = arith.constant 0 : i32
    %49 = arith.cmpi ne, %48, %c0_i32_26 : i32
    scf.if %49 {
      %c0_27 = arith.constant 0 : index
      %c0_28 = arith.constant 0 : index
      %50 = vector.load %arg7[%c0_27, %c0_28] : memref<16x128xf32, #tpu.memory_space<vmem>>, vector<16x128xf32>
      tpu.vector_store %arg7[%c0_27, %c0_28], %44 {strides = array<i32>} : memref<16x128xf32, #tpu.memory_space<vmem>>, vector<16x128xf32>,
    } else {
    }
    return
  }
  func.func @transform_0(%arg0: i32) -> (i32, i32) {
    %c0_i32 = arith.constant 0 : i32
    %c0_i32_0 = arith.constant 0 : i32
    %c0_i32_1 = arith.constant 0 : i32
    return %c0_i32, %c0_i32_0 : i32, i32
  }
  func.func @transform_1(%arg0: i32) -> (i32, i32) {
    %c0_i32 = arith.constant 0 : i32
    %c0_i32_0 = arith.constant 0 : i32
    %c0_i32_1 = arith.constant 0 : i32
    return %c0_i32, %c0_i32_0 : i32, i32
  }
  func.func @transform_2(%arg0: i32) -> (i32, i32, i32) {
    %c0_i32 = arith.constant 0 : i32
    %c0_i32_0 = arith.constant 0 : i32
    %c0_i32_1 = arith.constant 0 : i32
    return %arg0, %c0_i32, %c0_i32_0 : i32, i32, i32
  }
  func.func @transform_3(%arg0: i32) -> (i32, i32, i32) {
    %c0_i32 = arith.constant 0 : i32
    %c0_i32_0 = arith.constant 0 : i32
    %c0_i32_1 = arith.constant 0 : i32
    return %arg0, %c0_i32, %c0_i32_0 : i32, i32, i32
  }
  func.func @transform_4(%arg0: i32) -> (i32, i32, i32) {
    %c0_i32 = arith.constant 0 : i32
    %c0_i32_0 = arith.constant 0 : i32
    %c0_i32_1 = arith.constant 0 : i32
    return %arg0, %c0_i32, %c0_i32_0 : i32, i32, i32
  }
  func.func @transform_5(%arg0: i32) -> (i32, i32, i32) {
    %c0_i32 = arith.constant 0 : i32
    %c0_i32_0 = arith.constant 0 : i32
    %c0_i32_1 = arith.constant 0 : i32
    return %arg0, %c0_i32, %c0_i32_0 : i32, i32, i32
  }
  func.func @transform_6(%arg0: i32) -> (i32, i32) {
    %c0_i32 = arith.constant 0 : i32
    %c0_i32_0 = arith.constant 0 : i32
    %c0_i32_1 = arith.constant 0 : i32
    return %c0_i32, %c0_i32_0 : i32, i32
  }
}

</mosaic_0001>

<llo_original>
// kernel: gat_processor_forward.1
$region0: #{gat_processor_forward.1}
  #allocation0 [shape = 'u32[]', space=smem, size = 0x4, offset = 0x4, fixed_abs, tag = 'smem constant byte address 0x4 - core index']
  #allocation1 [shape = 'u32[144,128]{1,0:T(1,128)}', space=vmem, size = 0x12000, scoped, tag = 'internal scratch']
  #allocation2 [shape = 'f32[16,128]{1,0:T(8,128)}', space=vmem, size = 0x2000, scoped, tag = 'scratch operand']
  %s0 = inlined_call_operand.vmem [shape: f32[16,16], index: 0, kind: input, shape index: {}]
  %s1 = inlined_call_operand.vmem [shape: f32[16,128], index: 1, kind: input, shape index: {}]
  %s2 = inlined_call_operand.vmem [shape: f32[3,128,128], index: 2, kind: input, shape index: {}]
  %s3 = inlined_call_operand.vmem [shape: f32[3,128,1], index: 3, kind: input, shape index: {}]
  %s4 = inlined_call_operand.vmem [shape: f32[3,1,128], index: 4, kind: input, shape index: {}]
  %s5 = inlined_call_operand.vmem [shape: f32[3,1,128], index: 5, kind: input, shape index: {}]
  %s6 = inlined_call_operand.hbm [shape: f32[16,128], index: 6, kind: output, shape index: {}]
  %s7 = sld [smem:[#allocation0]]
  $region65: #{gat_processor_forward.1} parent=0
    _
  %s9 = ssub.s32 1, %s7
  %s10 = scalar_select 0, %s9, %s7
  $region1: #{gat_processor_forward.1} parent=0
    #allocation3 [shape = 'u8[8192]{0}', space=vmem, size = 0x2000, scoped, tag = 'output window, operand 0, single buffered']
    #allocation4 [shape = 's32[2]{0}', space=sflag, size = 0x8, scoped, tag = 'scoped memory for gat_processor_forward.1']
    %11 = vsyncpa [#allocation4], 0
    loop: start=0, step=1, limit=5
    $region2: #{gat_processor_forward.1} parent=1 // loop_pre_header
      _
    $region3: #{gat_processor_forward.1} parent=1 // loop_header
      %s13 = sphi 0, %s17
      %p14 = scmp.ge.s32.totalorder %s13, 5
      %s21 = sphi 0, %s21
      %s23 = sphi 0, %s21
      %s24 = sphi 0, %s23
      %s38 = sphi 0, %s24
      %s42 = sphi 0, %s42
      %s44 = sphi 0, %s42
      %s45 = sphi 0, %s44
      %s59 = sphi 0, %s45
      %s65 = sphi 0, %s67
      %s68 = sphi 0, %s65
      %s69 = sphi 0, %s68
      %s85 = sphi 0, %s69
      %s91 = sphi 0, %s93
      %s94 = sphi 0, %s91
      %s95 = sphi 0, %s94
      %s111 = sphi 0, %s95
      %s117 = sphi 0, %s119
      %s120 = sphi 0, %s117
      %s121 = sphi 0, %s120
      %s137 = sphi 0, %s121
      %s143 = sphi 0, %s145
      %s146 = sphi 0, %s143
      %s147 = sphi 0, %s146
      %s163 = sphi 0, %s147
      %s167 = sphi 0, %s167
      %s169 = sphi 0, %s167
      %s170 = sphi 0, %s169
      %s184 = sphi 0, %s170
    $region4: #{gat_processor_forward.1} parent=1 // loop_header_branch
      %16 = sbr.rel (%p14) target = $region8
    $region5: #{gat_processor_forward.1} parent=1 // loop_body
      %s18 = ssub.s32 %s13, 1
      %s19 = ssub.s32 %s13, 2
      %s20 = sadd.s32 %s13, 1
      %s22 = sadd.s32 %s21, 1
      %p25 = scmp.eq.s32.totalorder %s13, 2
      %p26 = scmp.ne.s32.totalorder %s21, %s23
      %p27 = scmp.eq.s32.totalorder %s13, 0
      %p28 = por %p26, %p27
      %p29 = scmp.ne.s32.totalorder %s21, %s23
      %p30 = scmp.eq.s32.totalorder %s18, 2
      %p31 = por %p29, %p30
      %p32 = scmp.ne.s32.totalorder %s23, %s24
      %p33 = scmp.eq.s32.totalorder %s18, 0
      %p34 = por %p32, %p33
      %p35 = scmp.ne.s32.totalorder %s23, %s24
      %p36 = scmp.eq.s32.totalorder %s19, 2
      %p37 = por %p35, %p36
      %p39 = scmp.ne.s32.totalorder %s24, %s38
      %p40 = scmp.eq.s32.totalorder %s19, 0
      %p41 = por %p39, %p40
      %s43 = sadd.s32 %s42, 1
      %p46 = scmp.eq.s32.totalorder %s13, 2
      %p47 = scmp.ne.s32.totalorder %s42, %s44
      %p48 = scmp.eq.s32.totalorder %s13, 0
      %p49 = por %p47, %p48
      %p50 = scmp.ne.s32.totalorder %s42, %s44
      %p51 = scmp.eq.s32.totalorder %s18, 2
      %p52 = por %p50, %p51
      %p53 = scmp.ne.s32.totalorder %s44, %s45
      %p54 = scmp.eq.s32.totalorder %s18, 0
      %p55 = por %p53, %p54
      %p56 = scmp.ne.s32.totalorder %s44, %s45
      %p57 = scmp.eq.s32.totalorder %s19, 2
      %p58 = por %p56, %p57
      %p60 = scmp.ne.s32.totalorder %s45, %s59
      %p61 = scmp.eq.s32.totalorder %s19, 0
      %p62 = por %p60, %p61
      %s63 = ssub.s32 %s13, %s20
      %p64 = scmp.eq.s32.totalorder %s63, 0
      %s66 = sadd.s32 %s65, 1
      %s67 = scalar_select %p64, %s65, %s66
      %p70 = pneg %p64
      %p71 = scmp.eq.s32.totalorder %s13, 2
      %p72 = por %p70, %p71
      %p73 = scmp.ne.s32.totalorder %s65, %s68
      %p74 = scmp.eq.s32.totalorder %s13, 0
      %p75 = por %p73, %p74
      %p76 = scmp.ne.s32.totalorder %s65, %s68
      %p77 = scmp.eq.s32.totalorder %s18, 2
      %p78 = por %p76, %p77
      %p79 = scmp.ne.s32.totalorder %s68, %s69
      %p80 = scmp.eq.s32.totalorder %s18, 0
      %p81 = por %p79, %p80
      %p82 = scmp.ne.s32.totalorder %s68, %s69
      %p83 = scmp.eq.s32.totalorder %s19, 2
      %p84 = por %p82, %p83
      %p86 = scmp.ne.s32.totalorder %s69, %s85
      %p87 = scmp.eq.s32.totalorder %s19, 0
      %p88 = por %p86, %p87
      %s89 = ssub.s32 %s13, %s20
      %p90 = scmp.eq.s32.totalorder %s89, 0
      %s92 = sadd.s32 %s91, 1
      %s93 = scalar_select %p90, %s91, %s92
      %p96 = pneg %p90
      %p97 = scmp.eq.s32.totalorder %s13, 2
      %p98 = por %p96, %p97
      %p99 = scmp.ne.s32.totalorder %s91, %s94
      %p100 = scmp.eq.s32.totalorder %s13, 0
      %p101 = por %p99, %p100
      %p102 = scmp.ne.s32.totalorder %s91, %s94
      %p103 = scmp.eq.s32.totalorder %s18, 2
      %p104 = por %p102, %p103
      %p105 = scmp.ne.s32.totalorder %s94, %s95
      %p106 = scmp.eq.s32.totalorder %s18, 0
      %p107 = por %p105, %p106
      %p108 = scmp.ne.s32.totalorder %s94, %s95
      %p109 = scmp.eq.s32.totalorder %s19, 2
      %p110 = por %p108, %p109
      %p112 = scmp.ne.s32.totalorder %s95, %s111
      %p113 = scmp.eq.s32.totalorder %s19, 0
      %p114 = por %p112, %p113
      %s115 = ssub.s32 %s13, %s20
      %p116 = scmp.eq.s32.totalorder %s115, 0
      %s118 = sadd.s32 %s117, 1
      %s119 = scalar_select %p116, %s117, %s118
      %p122 = pneg %p116
      %p123 = scmp.eq.s32.totalorder %s13, 2
      %p124 = por %p122, %p123
      %p125 = scmp.ne.s32.totalorder %s117, %s120
      %p126 = scmp.eq.s32.totalorder %s13, 0
      %p127 = por %p125, %p126
      %p128 = scmp.ne.s32.totalorder %s117, %s120
      %p129 = scmp.eq.s32.totalorder %s18, 2
      %p130 = por %p128, %p129
      %p131 = scmp.ne.s32.totalorder %s120, %s121
      %p132 = scmp.eq.s32.totalorder %s18, 0
      %p133 = por %p131, %p132
      %p134 = scmp.ne.s32.totalorder %s120, %s121
      %p135 = scmp.eq.s32.totalorder %s19, 2
      %p136 = por %p134, %p135
      %p138 = scmp.ne.s32.totalorder %s121, %s137
      %p139 = scmp.eq.s32.totalorder %s19, 0
      %p140 = por %p138, %p139
      %s141 = ssub.s32 %s13, %s20
      %p142 = scmp.eq.s32.totalorder %s141, 0
      %s144 = sadd.s32 %s143, 1
      %s145 = scalar_select %p142, %s143, %s144
      %p148 = pneg %p142
      %p149 = scmp.eq.s32.totalorder %s13, 2
      %p150 = por %p148, %p149
      %p151 = scmp.ne.s32.totalorder %s143, %s146
      %p152 = scmp.eq.s32.totalorder %s13, 0
      %p153 = por %p151, %p152
      %p154 = scmp.ne.s32.totalorder %s143, %s146
      %p155 = scmp.eq.s32.totalorder %s18, 2
      %p156 = por %p154, %p155
      %p157 = scmp.ne.s32.totalorder %s146, %s147
      %p158 = scmp.eq.s32.totalorder %s18, 0
      %p159 = por %p157, %p158
      %p160 = scmp.ne.s32.totalorder %s146, %s147
      %p161 = scmp.eq.s32.totalorder %s19, 2
      %p162 = por %p160, %p161
      %p164 = scmp.ne.s32.totalorder %s147, %s163
      %p165 = scmp.eq.s32.totalorder %s19, 0
      %p166 = por %p164, %p165
      %s168 = sadd.s32 %s167, 1
      %p171 = scmp.eq.s32.totalorder %s13, 2
      %p172 = scmp.ne.s32.totalorder %s167, %s169
      %p173 = scmp.eq.s32.totalorder %s13, 0
      %p174 = por %p172, %p173
      %p175 = scmp.ne.s32.totalorder %s167, %s169
      %p176 = scmp.eq.s32.totalorder %s18, 2
      %p177 = por %p175, %p176
      %p178 = scmp.ne.s32.totalorder %s169, %s170
      %p179 = scmp.eq.s32.totalorder %s18, 0
      %p180 = por %p178, %p179
      %p181 = scmp.ne.s32.totalorder %s169, %s170
      %p182 = scmp.eq.s32.totalorder %s19, 2
      %p183 = por %p181, %p182
      %p185 = scmp.ne.s32.totalorder %s170, %s184
      %p186 = scmp.eq.s32.totalorder %s19, 0
      %p187 = por %p185, %p186
      %p188 = scmp.le.s32.totalorder 1, %s13
      %p189 = scmp.lt.s32.totalorder %s13, 4
      %p190 = pnand %p188, %p189
      %p191 = pneg %p190
      // Predicated region
      $region9: #{gat_processor_forward.1} parent=5 // pred_check
        _
      $region10: #{gat_processor_forward.1} parent=5 // pred_check_branch
        %193 = sbr.rel (%p190) target = $region12
      $region11: #{gat_processor_forward.1} parent=5 // pred_region
        %s194 = ssub.s32 %s13, 1
        // Predicated region
        $region13: #{gat_processor_forward.1} parent=11 // pred_check
          %p195 = pneg %p34
        $region14: #{gat_processor_forward.1} parent=11 // pred_check_branch
          %197 = sbr.rel (%p195) target = $region16
        $region15: #{gat_processor_forward.1} parent=11 // pred_region
          _
        $region16: #{gat_processor_forward.1} parent=11 // pred_fallthru
          _
        // Predicated region
        $region17: #{gat_processor_forward.1} parent=11 // pred_check
          %p198 = pneg %p55
        $region18: #{gat_processor_forward.1} parent=11 // pred_check_branch
          %200 = sbr.rel (%p198) target = $region20
        $region19: #{gat_processor_forward.1} parent=11 // pred_region
          _
        $region20: #{gat_processor_forward.1} parent=11 // pred_fallthru
          _
      $region12: #{gat_processor_forward.1} parent=5 // pred_fallthru
        _
      %p201 = scmp.lt.s32.totalorder %s13, 3
      // Predicated region
      $region21: #{gat_processor_forward.1} parent=5 // pred_check
        %p202 = pneg %p201
      $region22: #{gat_processor_forward.1} parent=5 // pred_check_branch
        %204 = sbr.rel (%p202) target = $region24
      $region23: #{gat_processor_forward.1} parent=5 // pred_region
        // Predicated region
        $region25: #{gat_processor_forward.1} parent=23 // pred_check
          %p205 = pneg %p75
        $region26: #{gat_processor_forward.1} parent=23 // pred_check_branch
          %207 = sbr.rel (%p205) target = $region28
        $region27: #{gat_processor_forward.1} parent=23 // pred_region
          %p208 = scmp.lt.s32.totalorder %s13, 2
          %s209 = scalar_select %p208, %s13, 2
          %s210 = smul.addr %s209, 16
          %s211 = smul.addr %s210, 8
          %s212 = scalar_lea.vmem %s2, %s211
        $region28: #{gat_processor_forward.1} parent=23 // pred_fallthru
          _
        // Predicated region
        $region29: #{gat_processor_forward.1} parent=23 // pred_check
          %p213 = pneg %p101
        $region30: #{gat_processor_forward.1} parent=23 // pred_check_branch
          %215 = sbr.rel (%p213) target = $region32
        $region31: #{gat_processor_forward.1} parent=23 // pred_region
          %p216 = scmp.lt.s32.totalorder %s13, 2
          %s217 = scalar_select %p216, %s13, 2
          %s218 = smul.addr %s217, 16
          %s219 = smul.addr %s218, 8
          %s220 = scalar_lea.vmem %s3, %s219
        $region32: #{gat_processor_forward.1} parent=23 // pred_fallthru
          _
        // Predicated region
        $region33: #{gat_processor_forward.1} parent=23 // pred_check
          %p221 = pneg %p127
        $region34: #{gat_processor_forward.1} parent=23 // pred_check_branch
          %223 = sbr.rel (%p221) target = $region36
        $region35: #{gat_processor_forward.1} parent=23 // pred_region
          %p224 = scmp.lt.s32.totalorder %s13, 2
          %s225 = scalar_select %p224, %s13, 2
          %s226 = scalar_lea.vmem %s4, %s225
        $region36: #{gat_processor_forward.1} parent=23 // pred_fallthru
          _
        // Predicated region
        $region37: #{gat_processor_forward.1} parent=23 // pred_check
          %p227 = pneg %p153
        $region38: #{gat_processor_forward.1} parent=23 // pred_check_branch
          %229 = sbr.rel (%p227) target = $region40
        $region39: #{gat_processor_forward.1} parent=23 // pred_region
          %p230 = scmp.lt.s32.totalorder %s13, 2
          %s231 = scalar_select %p230, %s13, 2
          %s232 = scalar_lea.vmem %s5, %s231
        $region40: #{gat_processor_forward.1} parent=23 // pred_fallthru
          _
      $region24: #{gat_processor_forward.1} parent=5 // pred_fallthru
        _
      %p233 = scmp.le.s32.totalorder 1, %s13
      %p234 = scmp.lt.s32.totalorder %s13, 4
      %p235 = pnand %p233, %p234
      %p236 = pneg %p235
      // Predicated region
      $region41: #{gat_processor_forward.1} parent=5 // pred_check
        _
      $region42: #{gat_processor_forward.1} parent=5 // pred_check_branch
        %238 = sbr.rel (%p235) target = $region44
      $region43: #{gat_processor_forward.1} parent=5 // pred_region
        %s239 = ssub.s32 %s13, 1
        %p240 = pneg %p34
        %p241 = pneg %p31
        %p242 = pneg %p55
        %p243 = pneg %p52
        %p244 = scmp.lt.s32.totalorder %s18, 2
        %s245 = scalar_select %p244, %s18, 2
        %s246 = smul.addr %s245, 16
        %s247 = smul.addr %s246, 8
        %s248 = scalar_lea.vmem %s2, %s247
        %p249 = pneg %p81
        %p250 = pneg %p78
        %p251 = scmp.lt.s32.totalorder %s18, 2
        %s252 = scalar_select %p251, %s18, 2
        %s253 = smul.addr %s252, 16
        %s254 = smul.addr %s253, 8
        %s255 = scalar_lea.vmem %s3, %s254
        %p256 = pneg %p107
        %p257 = pneg %p104
        %p258 = scmp.lt.s32.totalorder %s18, 2
        %s259 = scalar_select %p258, %s18, 2
        %s260 = scalar_lea.vmem %s4, %s259
        %p261 = pneg %p133
        %p262 = pneg %p130
        %p263 = scmp.lt.s32.totalorder %s18, 2
        %s264 = scalar_select %p263, %s18, 2
        %s265 = scalar_lea.vmem %s5, %s264
        %p266 = pneg %p159
        %p267 = pneg %p156
        %p268 = pneg %p180
        %p269 = pneg %p177
        %p270 = scmp.lt.s32.totalorder %s18, 2
        %s271 = scalar_select %p270, %s18, 2
        %s272 = smul.addr %s271, 16
        %s273 = smul.addr %s272, 8
        %s274 = scalar_lea.vmem %s2, %s273
        %p275 = scmp.lt.s32.totalorder %s18, 2
        %s276 = scalar_select %p275, %s18, 2
        %s277 = smul.addr %s276, 16
        %s278 = smul.addr %s277, 8
        %s279 = scalar_lea.vmem %s3, %s278
        %p280 = scmp.lt.s32.totalorder %s18, 2
        %s281 = scalar_select %p280, %s18, 2
        %s282 = scalar_lea.vmem %s4, %s281
        %p283 = scmp.lt.s32.totalorder %s18, 2
        %s284 = scalar_select %p283, %s18, 2
        %s285 = scalar_lea.vmem %s5, %s284
        %p286 = scmp.eq.s32.totalorder %s18, 2
        %p287 = scmp.eq.s32.totalorder %s18, 0
        // Predicated region
        $region45: #{gat_processor_forward.1} parent=43 // pred_check
          %p288 = pneg %p287
        $region46: #{gat_processor_forward.1} parent=43 // pred_check_branch
          %290 = sbr.rel (%p288) target = $region48
        $region47: #{gat_processor_forward.1} parent=43 // pred_region
          %v291 = vld [vmem:[%s1] sm:$0xff]
          %v292 = vld [vmem:[%s1 + $0x8] sm:$0xff]
          %293 = vst [vmem:[#allocation2] sm:$0xff] %v291
          %294 = vst [vmem:[#allocation2 + $0x8] sm:$0xff] %v292
        $region48: #{gat_processor_forward.1} parent=43 // pred_fallthru
          _
        %v295 = vld [vmem:[#allocation2] sm:$0xff]
        %v296 = vld [vmem:[#allocation2 + $0x8] sm:$0xff]
        %v297 = vld [vmem:[%s274] sm:$0xff]
        %v298 = vld [vmem:[%s274 + $0x8] sm:$0xff]
        %v299 = vld [vmem:[%s274 + $0x10] sm:$0xff]
        %v300 = vld [vmem:[%s274 + $0x18] sm:$0xff]
        %v301 = vld [vmem:[%s274 + $0x20] sm:$0xff]
        %v302 = vld [vmem:[%s274 + $0x28] sm:$0xff]
        %v303 = vld [vmem:[%s274 + $0x30] sm:$0xff]
        %v304 = vld [vmem:[%s274 + $0x38] sm:$0xff]
        %v305 = vld [vmem:[%s274 + $0x40] sm:$0xff]
        %v306 = vld [vmem:[%s274 + $0x48] sm:$0xff]
        %v307 = vld [vmem:[%s274 + $0x50] sm:$0xff]
        %v308 = vld [vmem:[%s274 + $0x58] sm:$0xff]
        %v309 = vld [vmem:[%s274 + $0x60] sm:$0xff]
        %v310 = vld [vmem:[%s274 + $0x68] sm:$0xff]
        %v311 = vld [vmem:[%s274 + $0x70] sm:$0xff]
        %v312 = vld [vmem:[%s274 + $0x78] sm:$0xff]
        %313 = vmatprep.subr.mxu0 0.0
        %314 = vmatpush1.msra.mxu0 %v312
        %315 = vmatprep.subr.mxu0 0.0
        %316 = vmatpush1.msra.mxu0 %v311
        %317 = vmatprep.subr.mxu0 0.0
        %318 = vmatpush1.msra.mxu0 %v310
        %319 = vmatprep.subr.mxu0 0.0
        %320 = vmatpush1.msra.mxu0 %v309
        %321 = vmatprep.subr.mxu0 0.0
        %322 = vmatpush1.msra.mxu0 %v308
        %323 = vmatprep.subr.mxu0 0.0
        %324 = vmatpush1.msra.mxu0 %v307
        %325 = vmatprep.subr.mxu0 0.0
        %326 = vmatpush1.msra.mxu0 %v306
        %327 = vmatprep.subr.mxu0 0.0
        %328 = vmatpush1.msra.mxu0 %v305
        %329 = vmatprep.subr.mxu0 0.0
        %330 = vmatpush1.msra.mxu0 %v304
        %331 = vmatprep.subr.mxu0 0.0
        %332 = vmatpush1.msra.mxu0 %v303
        %333 = vmatprep.subr.mxu0 0.0
        %334 = vmatpush1.msra.mxu0 %v302
        %335 = vmatprep.subr.mxu0 0.0
        %336 = vmatpush1.msra.mxu0 %v301
        %337 = vmatprep.subr.mxu0 0.0
        %338 = vmatpush1.msra.mxu0 %v300
        %339 = vmatprep.subr.mxu0 0.0
        %340 = vmatpush1.msra.mxu0 %v299
        %341 = vmatprep.subr.mxu0 0.0
        %342 = vmatpush1.msra.mxu0 %v298
        %343 = vmatprep.subr.mxu0 0.0
        %344 = vmatpush1.msra.mxu0 %v297
        %345 = vmatprep.subr.mxu0 0.0
        %346 = vmatpush2.msra.mxu0 0.0
        %347 = vmatprep.subr.mxu0 0.0
        %348 = vmatpush2.msra.mxu0 0.0
        %349 = vmatprep.subr.mxu0 0.0
        %350 = vmatpush2.msra.mxu0 0.0
        %351 = vmatprep.subr.mxu0 0.0
        %352 = vmatpush2.msra.mxu0 0.0
        %353 = vmatprep.subr.mxu0 0.0
        %354 = vmatpush2.msra.mxu0 0.0
        %355 = vmatprep.subr.mxu0 0.0
        %356 = vmatpush2.msra.mxu0 0.0
        %357 = vmatprep.subr.mxu0 0.0
        %358 = vmatpush2.msra.mxu0 0.0
        %359 = vmatprep.subr.mxu0 0.0
        %360 = vmatpush2.msra.mxu0 0.0
        %361 = vmatprep.subr.mxu0 0.0
        %362 = vmatpush2.msra.mxu0 0.0
        %363 = vmatprep.subr.mxu0 0.0
        %364 = vmatpush2.msra.mxu0 0.0
        %365 = vmatprep.subr.mxu0 0.0
        %366 = vmatpush2.msra.mxu0 0.0
        %367 = vmatprep.subr.mxu0 0.0
        %368 = vmatpush2.msra.mxu0 0.0
        %369 = vmatprep.subr.mxu0 0.0
        %370 = vmatpush2.msra.mxu0 0.0
        %371 = vmatprep.subr.mxu0 0.0
        %372 = vmatpush2.msra.mxu0 0.0
        %373 = vmatprep.subr.mxu0 0.0
        %374 = vmatpush2.msra.mxu0 0.0
        %375 = vmatprep.subr.mxu0 0.0
        %376 = vmatpush2.msra.mxu0 0.0
        %377 = vmatprep.mubr.f32.mxu0 0.0
        %378 = vmatmul.mubr.f32.gmra.mxu0 %v295
        %v379 = vpop.f32.mrf.mxu0
        %v380 = vadd.f32 0.0, %v379
        %v381 = vpop.f32.mrf.mxu0
        %382 = vmatprep.mubr.f32.mxu0 0.0
        %383 = vmatmul.mubr.f32.gmra.mxu0 %v296
        %v384 = vpop.f32.mrf.mxu0
        %v385 = vadd.f32 0.0, %v384
        %v386 = vpop.f32.mrf.mxu0
        %387 = vdwg.mxu0
        %v388 = vld [vmem:[%s282] sm:$0x1]
        %v389 = vld [vmem:[%s279] sm:$0xff]
        %v390 = vld [vmem:[%s279 + $0x8] sm:$0xff]
        %v391 = vld [vmem:[%s279 + $0x10] sm:$0xff]
        %v392 = vld [vmem:[%s279 + $0x18] sm:$0xff]
        %v393 = vld [vmem:[%s279 + $0x20] sm:$0xff]
        %v394 = vld [vmem:[%s279 + $0x28] sm:$0xff]
        %v395 = vld [vmem:[%s279 + $0x30] sm:$0xff]
        %v396 = vld [vmem:[%s279 + $0x38] sm:$0xff]
        %v397 = vld [vmem:[%s279 + $0x40] sm:$0xff]
        %v398 = vld [vmem:[%s279 + $0x48] sm:$0xff]
        %v399 = vld [vmem:[%s279 + $0x50] sm:$0xff]
        %v400 = vld [vmem:[%s279 + $0x58] sm:$0xff]
        %v401 = vld [vmem:[%s279 + $0x60] sm:$0xff]
        %v402 = vld [vmem:[%s279 + $0x68] sm:$0xff]
        %v403 = vld [vmem:[%s279 + $0x70] sm:$0xff]
        %v404 = vld [vmem:[%s279 + $0x78] sm:$0xff]
        %v406 = vlaneseq
        %v407 = vshrl.u32 %v406, 7
        %v408 = vsub.s32 0, %v407
        %v409 = vrot.slane %v388, %v408
        %v411 = vmul.f32 %v380, %v409
        %v412 = vmul.f32 %v385, %v409
        %413 = vadd.xlane.f32.xlu0 %v411
        %v414 = vpop.xlane.xlu0 %413
        %415 = vadd.xlane.f32.xlu0 %v412
        %v416 = vpop.xlane.xlu0 %415
        %417 = vxpose.xlu0.b32.start [1/16] %v380, 128
        %418 = vxpose.xlu0.b32.cont [2/16] %v385, 128
        %419 = vxpose.xlu0.b32.cont [3/16] 0.0, 128
        %420 = vxpose.xlu0.b32.cont [4/16] 0.0, 128
        %421 = vxpose.xlu0.b32.cont [5/16] 0.0, 128
        %422 = vxpose.xlu0.b32.cont [6/16] 0.0, 128
        %423 = vxpose.xlu0.b32.cont [7/16] 0.0, 128
        %424 = vxpose.xlu0.b32.cont [8/16] 0.0, 128
        %425 = vxpose.xlu0.b32.cont [9/16] 0.0, 128
        %426 = vxpose.xlu0.b32.cont [10/16] 0.0, 128
        %427 = vxpose.xlu0.b32.cont [11/16] 0.0, 128
        %428 = vxpose.xlu0.b32.cont [12/16] 0.0, 128
        %429 = vxpose.xlu0.b32.cont [13/16] 0.0, 128
        %430 = vxpose.xlu0.b32.cont [14/16] 0.0, 128
        %431 = vxpose.xlu0.b32.cont [15/16] 0.0, 128
        %432 = vxpose.xlu0.b32.end [16/16] 0.0, 128
        %v433 = vpop.trf.xlu0
        %v434 = vpop.trf.xlu0
        %v435 = vpop.trf.xlu0
        %v436 = vpop.trf.xlu0
        %v437 = vpop.trf.xlu0
        %v438 = vpop.trf.xlu0
        %v439 = vpop.trf.xlu0
        %v440 = vpop.trf.xlu0
        %v441 = vpop.trf.xlu0
        %v442 = vpop.trf.xlu0
        %v443 = vpop.trf.xlu0
        %v444 = vpop.trf.xlu0
        %v445 = vpop.trf.xlu0
        %v446 = vpop.trf.xlu0
        %v447 = vpop.trf.xlu0
        %v448 = vpop.trf.xlu0
        %450 = vset.pattern.permute.xlu0 0
        %451 = vperm.xlu0 %450, %v389
        %v452 = vpop.permute.xlu0 %451
        %455 = vset.pattern.permute.xlu0 0
        %456 = vperm.xlu0 %455, %v390
        %v457 = vpop.permute.xlu0 %456
        %460 = vset.pattern.permute.xlu0 0
        %461 = vperm.xlu0 %460, %v391
        %v462 = vpop.permute.xlu0 %461
        %465 = vset.pattern.permute.xlu0 0
        %466 = vperm.xlu0 %465, %v392
        %v467 = vpop.permute.xlu0 %466
        %470 = vset.pattern.permute.xlu0 0
        %471 = vperm.xlu0 %470, %v393
        %v472 = vpop.permute.xlu0 %471
        %475 = vset.pattern.permute.xlu0 0
        %476 = vperm.xlu0 %475, %v394
        %v477 = vpop.permute.xlu0 %476
        %480 = vset.pattern.permute.xlu0 0
        %481 = vperm.xlu0 %480, %v395
        %v482 = vpop.permute.xlu0 %481
        %485 = vset.pattern.permute.xlu0 0
        %486 = vperm.xlu0 %485, %v396
        %v487 = vpop.permute.xlu0 %486
        %490 = vset.pattern.permute.xlu0 0
        %491 = vperm.xlu0 %490, %v397
        %v492 = vpop.permute.xlu0 %491
        %495 = vset.pattern.permute.xlu0 0
        %496 = vperm.xlu0 %495, %v398
        %v497 = vpop.permute.xlu0 %496
        %500 = vset.pattern.permute.xlu0 0
        %501 = vperm.xlu0 %500, %v399
        %v502 = vpop.permute.xlu0 %501
        %505 = vset.pattern.permute.xlu0 0
        %506 = vperm.xlu0 %505, %v400
        %v507 = vpop.permute.xlu0 %506
        %510 = vset.pattern.permute.xlu0 0
        %511 = vperm.xlu0 %510, %v401
        %v512 = vpop.permute.xlu0 %511
        %515 = vset.pattern.permute.xlu0 0
        %516 = vperm.xlu0 %515, %v402
        %v517 = vpop.permute.xlu0 %516
        %520 = vset.pattern.permute.xlu0 0
        %521 = vperm.xlu0 %520, %v403
        %v522 = vpop.permute.xlu0 %521
        %525 = vset.pattern.permute.xlu0 0
        %526 = vperm.xlu0 %525, %v404
        %v527 = vpop.permute.xlu0 %526
        %v529 = vmul.f32 %v433, %v452
        %v530 = vmul.f32 %v434, %v457
        %v531 = vmul.f32 %v435, %v462
        %v532 = vmul.f32 %v436, %v467
        %v533 = vmul.f32 %v437, %v472
        %v534 = vmul.f32 %v438, %v477
        %v535 = vmul.f32 %v439, %v482
        %v536 = vmul.f32 %v440, %v487
        %v537 = vmul.f32 %v441, %v492
        %v538 = vmul.f32 %v442, %v497
        %v539 = vmul.f32 %v443, %v502
        %v540 = vmul.f32 %v444, %v507
        %v541 = vmul.f32 %v445, %v512
        %v542 = vmul.f32 %v446, %v517
        %v543 = vmul.f32 %v447, %v522
        %v544 = vmul.f32 %v448, %v527
        %vm545 = vcmask 130048
        %v546 = vsel %vm545, %v529, 0.0
        %v547 = vsel %vm545, %v530, 0.0
        %v548 = vadd.f32 %v546, %v547
        %v549 = vsel %vm545, %v531, 0.0
        %v550 = vadd.f32 %v548, %v549
        %v551 = vsel %vm545, %v532, 0.0
        %v552 = vadd.f32 %v550, %v551
        %v553 = vsel %vm545, %v533, 0.0
        %v554 = vadd.f32 %v552, %v553
        %v555 = vsel %vm545, %v534, 0.0
        %v556 = vadd.f32 %v554, %v555
        %v557 = vsel %vm545, %v535, 0.0
        %v558 = vadd.f32 %v556, %v557
        %v559 = vsel %vm545, %v536, 0.0
        %v560 = vadd.f32 %v558, %v559
        %v561 = vsel %vm545, %v537, 0.0
        %v562 = vadd.f32 %v560, %v561
        %v563 = vsel %vm545, %v538, 0.0
        %v564 = vadd.f32 %v562, %v563
        %v565 = vsel %vm545, %v539, 0.0
        %v566 = vadd.f32 %v564, %v565
        %v567 = vsel %vm545, %v540, 0.0
        %v568 = vadd.f32 %v566, %v567
        %v569 = vsel %vm545, %v541, 0.0
        %v570 = vadd.f32 %v568, %v569
        %v571 = vsel %vm545, %v542, 0.0
        %v572 = vadd.f32 %v570, %v571
        %v573 = vsel %vm545, %v543, 0.0
        %v574 = vadd.f32 %v572, %v573
        %v575 = vsel %vm545, %v544, 0.0
        %v576 = vadd.f32 %v574, %v575
        %v577 = vrot.slane %v576, 4
        %v578 = vadd.f32 %v576, %v577
        %v579 = vrot.slane %v578, 2
        %v580 = vadd.f32 %v578, %v579
        %v581 = vrot.slane %v580, 1
        %v582 = vadd.f32 %v580, %v581
        %v583 = vadd.f32 %v414, %v582
        %v584 = vadd.f32 %v416, %v582
        %vm585 = vcmp.gt.f32.partialorder %v583, 0.0
        %vm586 = vcmp.gt.f32.partialorder %v584, 0.0
        %v587 = vmul.f32 %v583, 0.2
        %v588 = vmul.f32 %v584, 0.2
        %v589 = vsel %vm585, %v583, %v587
        %v590 = vsel %vm586, %v584, %v588
        %v591 = vld [vmem:[%s0] sm:$0xff]
        %v592 = vld [vmem:[%s0 + $0x8] sm:$0xff]
        %v593 = vadd.f32 %v589, %v591
        %v594 = vadd.f32 %v590, %v592
        %v595 = vsel %vm545, %v593, -inf
        %596 = vmax.xlane.f32.xlu0 %v595
        %v597 = vpop.xlane.xlu0 %596
        %v598 = vsel %vm545, %v594, -inf
        %599 = vmax.xlane.f32.xlu0 %v598
        %v600 = vpop.xlane.xlu0 %599
        %v601 = vsub.f32 %v593, %v597
        %v602 = vsub.f32 %v594, %v600
        %v603 = vmul.f32 %v601, 1.442695
        %v604 = vpow.pop %v603
        %v605 = vmul.f32 %v602, 1.442695
        %v606 = vpow.pop %v605
        %v607 = vsel %vm545, %v604, 0.0
        %608 = vadd.xlane.f32.xlu0 %v607
        %v609 = vpop.xlane.xlu0 %608
        %v610 = vsel %vm545, %v606, 0.0
        %611 = vadd.xlane.f32.xlu0 %v610
        %v612 = vpop.xlane.xlu0 %611
        %v613 = vrcp.pop %v609
        %v614 = vmul.f32 %v604, %v613
        %v615 = vrcp.pop %v612
        %v616 = vmul.f32 %v606, %v615
        %v617 = vld [vmem:[%s285] sm:$0x1]
        %v619 = vlaneseq
        %v620 = vshrl.u32 %v619, 7
        %v621 = vsub.s32 0, %v620
        %v622 = vrot.slane %v617, %v621
        %v625 = vsel %vm545, %v614, 0
        %v628 = vsel %vm545, %v616, 0
        %630 = vmatprep.subr.mxu0 0.0
        %631 = vmatpush1.msra.mxu0 0.0
        %632 = vmatprep.subr.mxu0 0.0
        %633 = vmatpush1.msra.mxu0 0.0
        %634 = vmatprep.subr.mxu0 0.0
        %635 = vmatpush1.msra.mxu0 0.0
        %636 = vmatprep.subr.mxu0 0.0
        %637 = vmatpush1.msra.mxu0 0.0
        %638 = vmatprep.subr.mxu0 0.0
        %639 = vmatpush1.msra.mxu0 0.0
        %640 = vmatprep.subr.mxu0 0.0
        %641 = vmatpush1.msra.mxu0 0.0
        %642 = vmatprep.subr.mxu0 0.0
        %643 = vmatpush1.msra.mxu0 0.0
        %644 = vmatprep.subr.mxu0 0.0
        %645 = vmatpush1.msra.mxu0 0.0
        %646 = vmatprep.subr.mxu0 0.0
        %647 = vmatpush1.msra.mxu0 0.0
        %648 = vmatprep.subr.mxu0 0.0
        %649 = vmatpush1.msra.mxu0 0.0
        %650 = vmatprep.subr.mxu0 0.0
        %651 = vmatpush1.msra.mxu0 0.0
        %652 = vmatprep.subr.mxu0 0.0
        %653 = vmatpush1.msra.mxu0 0.0
        %654 = vmatprep.subr.mxu0 0.0
        %655 = vmatpush1.msra.mxu0 0.0
        %656 = vmatprep.subr.mxu0 0.0
        %657 = vmatpush1.msra.mxu0 0.0
        %658 = vmatprep.subr.mxu0 0.0
        %659 = vmatpush1.msra.mxu0 %v385
        %660 = vmatprep.subr.mxu0 0.0
        %661 = vmatpush1.msra.mxu0 %v380
        %662 = vmatprep.subr.mxu0 0.0
        %663 = vmatpush2.msra.mxu0 0.0
        %664 = vmatprep.subr.mxu0 0.0
        %665 = vmatpush2.msra.mxu0 0.0
        %666 = vmatprep.subr.mxu0 0.0
        %667 = vmatpush2.msra.mxu0 0.0
        %668 = vmatprep.subr.mxu0 0.0
        %669 = vmatpush2.msra.mxu0 0.0
        %670 = vmatprep.subr.mxu0 0.0
        %671 = vmatpush2.msra.mxu0 0.0
        %672 = vmatprep.subr.mxu0 0.0
        %673 = vmatpush2.msra.mxu0 0.0
        %674 = vmatprep.subr.mxu0 0.0
        %675 = vmatpush2.msra.mxu0 0.0
        %676 = vmatprep.subr.mxu0 0.0
        %677 = vmatpush2.msra.mxu0 0.0
        %678 = vmatprep.subr.mxu0 0.0
        %679 = vmatpush2.msra.mxu0 0.0
        %680 = vmatprep.subr.mxu0 0.0
        %681 = vmatpush2.msra.mxu0 0.0
        %682 = vmatprep.subr.mxu0 0.0
        %683 = vmatpush2.msra.mxu0 0.0
        %684 = vmatprep.subr.mxu0 0.0
        %685 = vmatpush2.msra.mxu0 0.0
        %686 = vmatprep.subr.mxu0 0.0
        %687 = vmatpush2.msra.mxu0 0.0
        %688 = vmatprep.subr.mxu0 0.0
        %689 = vmatpush2.msra.mxu0 0.0
        %690 = vmatprep.subr.mxu0 0.0
        %691 = vmatpush2.msra.mxu0 0.0
        %692 = vmatprep.subr.mxu0 0.0
        %693 = vmatpush2.msra.mxu0 0.0
        %694 = vmatprep.mubr.f32.mxu0 0.0
        %695 = vmatmul.mubr.f32.gmra.mxu0 %v625
        %v696 = vpop.f32.mrf.mxu0
        %v697 = vadd.f32 %v622, %v696
        %v698 = vpop.f32.mrf.mxu0
        %699 = vmatprep.mubr.f32.mxu0 0.0
        %700 = vmatmul.mubr.f32.gmra.mxu0 %v628
        %v701 = vpop.f32.mrf.mxu0
        %v702 = vadd.f32 %v622, %v701
        %v703 = vpop.f32.mrf.mxu0
        %704 = vdwg.mxu0
        %v705 = vmax.f32 %v697, 0.0
        %v706 = vmax.f32 %v702, 0.0
        %707 = vst [vmem:[#allocation2] sm:$0xff] %v705
        %708 = vst [vmem:[#allocation2 + $0x8] sm:$0xff] %v706
        // Predicated region
        $region49: #{gat_processor_forward.1} parent=43 // pred_check
          %p709 = pneg %p286
        $region50: #{gat_processor_forward.1} parent=43 // pred_check_branch
          %711 = sbr.rel (%p709) target = $region52
        $region51: #{gat_processor_forward.1} parent=43 // pred_region
          %712 = vst [vmem:[#allocation3] sm:$0xff] %v697
          %713 = vst [vmem:[#allocation3 + $0x8] sm:$0xff] %v702
        $region52: #{gat_processor_forward.1} parent=43 // pred_fallthru
          _
        // Predicated region
        $region53: #{gat_processor_forward.1} parent=43 // pred_check
          %p714 = pneg %p177
        $region54: #{gat_processor_forward.1} parent=43 // pred_check_branch
          %716 = sbr.rel (%p714) target = $region56
        $region55: #{gat_processor_forward.1} parent=43 // pred_region
          %s718 = ssub.s32 256, 256
          %719 = vsyncadd [#allocation4], %s718
          %s720 = sshll.u32 [#allocation3], 4
          %s721 = int_to_ptr.vmem [resolvable:$true] %s720
          %726 = dma.vmem_to_hbm [thread:$0]  %s721, 256, %s6, [#allocation4], 128, 128, 8
        $region56: #{gat_processor_forward.1} parent=43 // pred_fallthru
          _
        // Predicated region
        $region57: #{gat_processor_forward.1} parent=43 // pred_check
          %p727 = pneg %p177
        $region58: #{gat_processor_forward.1} parent=43 // pred_check_branch
          %729 = sbr.rel (%p727) target = $region60
        $region59: #{gat_processor_forward.1} parent=43 // pred_region
          %730 = dma.done [#allocation4], 256
        $region60: #{gat_processor_forward.1} parent=43 // pred_fallthru
          _
      $region44: #{gat_processor_forward.1} parent=5 // pred_fallthru
        _
      %p731 = scmp.le.s32.totalorder 2, %s13
      // Predicated region
      $region61: #{gat_processor_forward.1} parent=5 // pred_check
        %p732 = pneg %p731
      $region62: #{gat_processor_forward.1} parent=5 // pred_check_branch
        %734 = sbr.rel (%p732) target = $region64
      $region63: #{gat_processor_forward.1} parent=5 // pred_region
        %s735 = ssub.s32 %s13, 2
      $region64: #{gat_processor_forward.1} parent=5 // pred_fallthru
        _
    $region6: #{gat_processor_forward.1} parent=1 // loop_footer
      %s17 = sadd.s32 1, %s13
    $region7: #{gat_processor_forward.1} parent=1 // loop_footer_branch
      %12 = sbr.rel target = $region3
    $region8: #{gat_processor_forward.1} parent=1 // loop_exit
      _
    %736 = vsyncpa [#allocation4], 1
    %s737 = scalar_lea.sflag [#allocation4], 1
    %738 = vsyncpa %s737, 1

</llo_original>
